<compile_context>
chip_gen: v7x
topology: tpu7x:2x2x1
jax: 0.10.0
libtpu: 0.0.40
codegen_flags: <defaults>
</compile_context>

<pallas_src>
import math

import jax
import jax.numpy as jnp
from jax.experimental import pallas as pl
from jax.experimental.pallas import tpu as pltpu

_TILE_N_MAX = 2048     # token-tile rows (perf review: 1024-2048)
_LANE = 128            # TPU lane width; gate-block alignment target


def _round_up(v, m):
    return ((v + m - 1) // m) * m


def _scoped_vmem_limit():
    """Per-generation scoped-VMEM budget (v5e/v6e ~96 MiB, v7x <=48 MiB)."""
    cap = 64 * 1024 * 1024            # conservative (v7x) fallback
    try:
        cap = int(getattr(pltpu.get_tpu_info(), "vmem_capacity_bytes", cap))
    except Exception:
        pass
    return max(min((cap * 3) // 4, 96 * 1024 * 1024), 32 * 1024 * 1024)


# ----------------------------------------------------------------------------
# Kernel: n_highway_layers of Highway on a (tile_n, Ep) token tile.
#   x:(tile_n, Ep) f32 ; w:(L, Ep, 3Ep) bf16 columns = [gate | non_linear | linear]
#   b:(L, 1, 3Ep) f32 ; out:(tile_n, Ep) f32
# Padded feature columns (>= E) carry zero weights/bias -> stay exactly 0.
# ----------------------------------------------------------------------------
def highway_kernel(x_ref, w_ref, b_ref, out_ref):
    Ep = out_ref.shape[-1]
    n_layers = w_ref.shape[0]                        # static python int
    h = x_ref[...]                                   # f32
    for l in range(n_layers):
        # one fused (tile_n, Ep) @ (Ep, 3Ep) MXU push per layer (bf16 operands,
        # f32 accumulation); branch boundaries are 128-lane aligned.
        z = jnp.dot(h.astype(jnp.bfloat16), w_ref[l],
                    preferred_element_type=jnp.float32) + b_ref[l]
        gate = jax.nn.sigmoid(z[:, 0:Ep])
        non_linear = jnp.maximum(z[:, Ep:2 * Ep], 0.0)
        linear = z[:, 2 * Ep:3 * Ep]
        # gate*nl + (1-gate)*lin rewritten to save one VPU multiply per element
        h = linear + gate * (non_linear - linear)
    out_ref[...] = h.astype(out_ref.dtype)


# ----------------------------------------------------------------------------
# Wrapper: flatten tokens, 1-D parallel grid over token tiles.
# ----------------------------------------------------------------------------
@jax.jit
def highway_forward(x, kp):
    orig_shape = x.shape
    E = x.shape[-1]
    L, Ep, _ = kp["w_hw"].shape
    N = math.prod(orig_shape[:-1])

    x_flat = x.reshape(N, E).astype(jnp.float32)
    if Ep != E:
        # feature-dim zero pad to the lane-aligned width (no-op when E % 128 == 0)
        x_flat = jnp.pad(x_flat, ((0, 0), (0, Ep - E)))

    tile_n = min(_TILE_N_MAX, _round_up(N, 8))
    grid_n = pl.cdiv(N, tile_n)      # ragged tail handled by masked stores

    out = pl.pallas_call(
        highway_kernel,
        out_shape=jax.ShapeDtypeStruct((N, Ep), jnp.float32),
        grid=(grid_n,),
        in_specs=[
            pl.BlockSpec((tile_n, Ep), lambda i: (i, 0)),
            pl.BlockSpec(kp["w_hw"].shape, lambda i: (0, 0, 0)),   # replicated
            pl.BlockSpec(kp["b_hw"].shape, lambda i: (0, 0, 0)),   # replicated
        ],
        out_specs=pl.BlockSpec((tile_n, Ep), lambda i: (i, 0)),
        compiler_params=pltpu.CompilerParams(
            dimension_semantics=("parallel",),
            vmem_limit_bytes=_scoped_vmem_limit()),
    )(x_flat, kp["w_hw"], kp["b_hw"])

    if Ep != E:
        out = out[:, :E]
    return out.reshape(orig_shape)


# ----------------------------------------------------------------------------
# Parameter init (PyTorch nn.Linear layout) + host-side one-time prep:
# fuse [gate | non_linear | linear], pre-transpose, lane-pad, bf16-cast.
# ----------------------------------------------------------------------------
def init_params(key, emb_size, n_highway_layers):
    E, L = emb_size, n_highway_layers
    ks = jax.random.split(key, 6)

    def unif(k, shape, fan_in):
        bound = 1.0 / math.sqrt(fan_in)
        return jax.random.uniform(k, shape, jnp.float32, -bound, bound)

    return {
        # nn.Linear(E, E).weight is (out_features, in_features); bias (E,)
        "w_gate": unif(ks[0], (L, E, E), E), "b_gate": unif(ks[1], (L, 1, E), E),
        "w_nl":   unif(ks[2], (L, E, E), E), "b_nl":   unif(ks[3], (L, 1, E), E),
        "w_lin":  unif(ks[4], (L, E, E), E), "b_lin":  unif(ks[5], (L, 1, E), E),
    }


def prepare_params(params, lane=_LANE):
    L, E, _ = params["w_gate"].shape
    Ep = _round_up(E, lane)

    def pad_w(w):                                    # (L, out E, in E) torch layout
        wt = jnp.swapaxes(w, 1, 2)                   # (L, in E, out E)
        return jnp.pad(wt, ((0, 0), (0, Ep - E), (0, Ep - E)))

    def pad_b(b):                                    # (L, 1, E)
        return jnp.pad(b, ((0, 0), (0, 0), (0, Ep - E)))

    w_hw = jnp.concatenate(
        [pad_w(params["w_gate"]), pad_w(params["w_nl"]), pad_w(params["w_lin"])],
        axis=2)                                      # (L, Ep, 3Ep)
    b_hw = jnp.concatenate(
        [pad_b(params["b_gate"]), pad_b(params["b_nl"]), pad_b(params["b_lin"])],
        axis=2)                                      # (L, 1, 3Ep)
    return {"w_hw": w_hw.astype(jnp.bfloat16), "b_hw": b_hw.astype(jnp.float32)}


# ----------------------------------------------------------------------------
# Pure-JAX float32 reference of the PyTorch Highway forward (for tolerance check).
# ----------------------------------------------------------------------------
def highway_reference(x, params):
    L = params["w_gate"].shape[0]
    h = x
    for l in range(L):
        gate = jax.nn.sigmoid(h @ params["w_gate"][l].T + params["b_gate"][l])
        non_linear = jax.nn.relu(h @ params["w_nl"][l].T + params["b_nl"][l])
        linear = h @ params["w_lin"][l].T + params["b_lin"][l]
        h = gate * non_linear + (1.0 - gate) * linear
    return h


if __name__ == "__main__":
    # Small config: batch=2, seq=8, emb_size=32, n_highway_layers=2.
    B, S, E, L = 2, 8, 32, 2

    key = jax.random.PRNGKey(0)
    kx, kp_key = jax.random.split(key)
    x = jax.random.normal(kx, (B, S, E), jnp.float32)

    params = init_params(kp_key, E, L)
    kparams = prepare_params(params)

    out = highway_forward(x, kparams)
    out = jax.block_until_ready(out)

    assert out.shape == (B, S, E), out.shape
    assert bool(jnp.all(jnp.isfinite(out)))

    # Tolerance check vs. float32 reference (kernel uses bf16 MXU operands).
    ref = highway_reference(x, params)
    max_err = float(jnp.max(jnp.abs(out - ref)))
    assert max_err < 5e-2, f"max abs err vs f32 reference: {max_err}"

    print("KERNEL_OK")
</pallas_src>

<mosaic_0001>
module attributes {stable_mosaic.version = 11 : i64} {
  func.func @highway_kernel(%arg0: i32, %arg1: memref<16x128xf32, #tpu.memory_space<vmem>>, %arg2: memref<2x128x384xbf16, #tpu.memory_space<vmem>>, %arg3: memref<2x1x384xf32, #tpu.memory_space<vmem>>, %arg4: memref<16x128xf32, #tpu.memory_space<vmem>>) attributes {dimension_semantics = [#tpu.dimension_semantics<parallel>], iteration_bounds = array<i64: 1>, scalar_prefetch = 0 : i64, scratch_operands = 0 : i64, tpu.core_type = #tpu.core_type<tc>, window_params = [{transform_indices = @transform_0, window_bounds = array<i64: 16, 128>}, {pipeline_mode = #tpu.pipeline_mode<synchronous>, transform_indices = @transform_1, window_bounds = array<i64: 2, 128, 384>}, {pipeline_mode = #tpu.pipeline_mode<synchronous>, transform_indices = @transform_2, window_bounds = array<i64: 2, 1, 384>}, {transform_indices = @transform_3, window_bounds = array<i64: 16, 128>}]} {
    %c0 = arith.constant 0 : index
    %c0_0 = arith.constant 0 : index
    %0 = vector.load %arg1[%c0, %c0_0] : memref<16x128xf32, #tpu.memory_space<vmem>>, vector<16x128xf32>
    %1 = arith.truncf %0 : vector<16x128xf32> to vector<16x128xbf16>
    %c0_1 = arith.constant 0 : index
    %c0_2 = arith.constant 0 : index
    %c0_3 = arith.constant 0 : index
    %2 = vector.load %arg2[%c0_1, %c0_2, %c0_3] : memref<2x128x384xbf16, #tpu.memory_space<vmem>>, vector<1x128x384xbf16>
    %3 = vector.shape_cast %2 : vector<1x128x384xbf16> to vector<128x384xbf16>
    %cst = arith.constant dense<0.000000e+00> : vector<16x384xf32>
    %4 = tpu.matmul %1, %3, %cst {dimension_numbers = #tpu.dot_dimension_numbers<[1], [0], [0], [1], [0, 0, 1, 1], [], []>} : vector<16x128xbf16>, vector<128x384xbf16>, vector<16x384xf32> -> vector<16x384xf32>
    %c0_4 = arith.constant 0 : index
    %c0_5 = arith.constant 0 : index
    %c0_6 = arith.constant 0 : index
    %5 = vector.load %arg3[%c0_4, %c0_5, %c0_6] : memref<2x1x384xf32, #tpu.memory_space<vmem>>, vector<1x1x384xf32>
    %6 = vector.shape_cast %5 : vector<1x1x384xf32> to vector<1x384xf32>
    %7 = vector.broadcast %6 : vector<1x384xf32> to vector<16x384xf32>
    %8 = arith.addf %4, %7 : vector<16x384xf32>
    %9 = vector.extract_strided_slice %8 {offsets = [0, 0], sizes = [16, 128], strides = [1, 1]} : vector<16x384xf32> to vector<16x128xf32>
    %10 = arith.negf %9 : vector<16x128xf32>
    %11 = math.exp %10 : vector<16x128xf32>
    %cst_7 = arith.constant 1.000000e+00 : f32
    %12 = vector.broadcast %cst_7 : f32 to vector<16x128xf32>
    %13 = arith.addf %12, %11 : vector<16x128xf32>
    %14 = arith.divf %12, %13 : vector<16x128xf32>
    %15 = vector.extract_strided_slice %8 {offsets = [0, 128], sizes = [16, 128], strides = [1, 1]} : vector<16x384xf32> to vector<16x128xf32>
    %cst_8 = arith.constant 0.000000e+00 : f32
    %16 = vector.broadcast %cst_8 : f32 to vector<16x128xf32>
    %17 = arith.maximumf %15, %16 : vector<16x128xf32>
    %18 = vector.extract_strided_slice %8 {offsets = [0, 256], sizes = [16, 128], strides = [1, 1]} : vector<16x384xf32> to vector<16x128xf32>
    %19 = arith.subf %17, %18 : vector<16x128xf32>
    %20 = arith.mulf %14, %19 : vector<16x128xf32>
    %21 = arith.addf %18, %20 : vector<16x128xf32>
    %22 = arith.truncf %21 : vector<16x128xf32> to vector<16x128xbf16>
    %c1 = arith.constant 1 : index
    %c0_9 = arith.constant 0 : index
    %c0_10 = arith.constant 0 : index
    %23 = vector.load %arg2[%c1, %c0_9, %c0_10] : memref<2x128x384xbf16, #tpu.memory_space<vmem>>, vector<1x128x384xbf16>
    %24 = vector.shape_cast %23 : vector<1x128x384xbf16> to vector<128x384xbf16>
    %cst_11 = arith.constant dense<0.000000e+00> : vector<16x384xf32>
    %25 = tpu.matmul %22, %24, %cst_11 {dimension_numbers = #tpu.dot_dimension_numbers<[1], [0], [0], [1], [0, 0, 1, 1], [], []>} : vector<16x128xbf16>, vector<128x384xbf16>, vector<16x384xf32> -> vector<16x384xf32>
    %c1_12 = arith.constant 1 : index
    %c0_13 = arith.constant 0 : index
    %c0_14 = arith.constant 0 : index
    %26 = vector.load %arg3[%c1_12, %c0_13, %c0_14] : memref<2x1x384xf32, #tpu.memory_space<vmem>>, vector<1x1x384xf32>
    %27 = vector.shape_cast %26 : vector<1x1x384xf32> to vector<1x384xf32>
    %28 = vector.broadcast %27 : vector<1x384xf32> to vector<16x384xf32>
    %29 = arith.addf %25, %28 : vector<16x384xf32>
    %30 = vector.extract_strided_slice %29 {offsets = [0, 0], sizes = [16, 128], strides = [1, 1]} : vector<16x384xf32> to vector<16x128xf32>
    %31 = arith.negf %30 : vector<16x128xf32>
    %32 = math.exp %31 : vector<16x128xf32>
    %cst_15 = arith.constant 1.000000e+00 : f32
    %33 = vector.broadcast %cst_15 : f32 to vector<16x128xf32>
    %34 = arith.addf %33, %32 : vector<16x128xf32>
    %35 = arith.divf %33, %34 : vector<16x128xf32>
    %36 = vector.extract_strided_slice %29 {offsets = [0, 128], sizes = [16, 128], strides = [1, 1]} : vector<16x384xf32> to vector<16x128xf32>
    %cst_16 = arith.constant 0.000000e+00 : f32
    %37 = vector.broadcast %cst_16 : f32 to vector<16x128xf32>
    %38 = arith.maximumf %36, %37 : vector<16x128xf32>
    %39 = vector.extract_strided_slice %29 {offsets = [0, 256], sizes = [16, 128], strides = [1, 1]} : vector<16x384xf32> to vector<16x128xf32>
    %40 = arith.subf %38, %39 : vector<16x128xf32>
    %41 = arith.mulf %35, %40 : vector<16x128xf32>
    %42 = arith.addf %39, %41 : vector<16x128xf32>
    %c0_17 = arith.constant 0 : index
    %c0_18 = arith.constant 0 : index
    %43 = vector.load %arg4[%c0_17, %c0_18] : memref<16x128xf32, #tpu.memory_space<vmem>>, vector<16x128xf32>
    tpu.vector_store %arg4[%c0_17, %c0_18], %42 {strides = array<i32>} : memref<16x128xf32, #tpu.memory_space<vmem>>, vector<16x128xf32>,
    return
  }
  func.func @transform_0(%arg0: i32) -> (i32, i32) {
    %c0_i32 = arith.constant 0 : i32
    %c0_i32_0 = arith.constant 0 : i32
    return %arg0, %c0_i32 : i32, i32
  }
  func.func @transform_1(%arg0: i32) -> (i32, i32, i32) {
    %c0_i32 = arith.constant 0 : i32
    %c0_i32_0 = arith.constant 0 : i32
    %c0_i32_1 = arith.constant 0 : i32
    %c0_i32_2 = arith.constant 0 : i32
    return %c0_i32, %c0_i32_0, %c0_i32_1 : i32, i32, i32
  }
  func.func @transform_2(%arg0: i32) -> (i32, i32, i32) {
    %c0_i32 = arith.constant 0 : i32
    %c0_i32_0 = arith.constant 0 : i32
    %c0_i32_1 = arith.constant 0 : i32
    %c0_i32_2 = arith.constant 0 : i32
    return %c0_i32, %c0_i32_0, %c0_i32_1 : i32, i32, i32
  }
  func.func @transform_3(%arg0: i32) -> (i32, i32) {
    %c0_i32 = arith.constant 0 : i32
    %c0_i32_0 = arith.constant 0 : i32
    return %arg0, %c0_i32 : i32, i32
  }
}

</mosaic_0001>

<llo_original>
// kernel: highway_forward.1
$region0: #{highway_forward.1}
  #allocation0 [shape = 'u32[]', space=smem, size = 0x4, offset = 0x4, fixed_abs, tag = 'smem constant byte address 0x4 - core index']
  #allocation1 [shape = 'u32[144,128]{1,0:T(1,128)}', space=vmem, size = 0x12000, scoped, tag = 'internal scratch']
  %s0 = inlined_call_operand.vmem [shape: f32[16,128], index: 0, kind: input, shape index: {}]
  %s1 = inlined_call_operand.hbm [shape: bf16[2,128,384], index: 1, kind: input, shape index: {}]
  %s2 = inlined_call_operand.vmem [shape: f32[2,1,384], index: 2, kind: input, shape index: {}]
  %s3 = inlined_call_operand.vmem [shape: f32[16,128], index: 3, kind: output, shape index: {}]
  %s4 = sld [smem:[#allocation0]]
  $region26: #{highway_forward.1} parent=0
    _
  %s6 = ssub.s32 1, %s4
  %s7 = scalar_select 0, %s6, %s4
  $region1: #{highway_forward.1} parent=0
    #allocation2 [shape = 'u8[196608]{0}', space=vmem, size = 0x30000, scoped, tag = 'input window, operand 1, single buffered']
    #allocation3 [shape = 's32[1]{0}', space=sflag, size = 0x4, scoped, tag = 'scoped memory for highway_forward.1']
    %8 = vsyncpa [#allocation3], 0
    // Predicated region
    $region2: #{highway_forward.1} parent=1 // pred_check
      _
    $region3: #{highway_forward.1} parent=1 // pred_check_branch
      %10 = sbr.rel (0) target = $region5
    $region4: #{highway_forward.1} parent=1 // pred_region
      _
    $region5: #{highway_forward.1} parent=1 // pred_fallthru
      _
    // Predicated region
    $region6: #{highway_forward.1} parent=1 // pred_check
      _
    $region7: #{highway_forward.1} parent=1 // pred_check_branch
      %12 = sbr.rel (0) target = $region9
    $region8: #{highway_forward.1} parent=1 // pred_region
      %s14 = ssub.s32 6144, 6144
      %15 = vsyncadd [#allocation3], %s14
      %s16 = sshll.u32 [#allocation2], 4
      %s17 = int_to_ptr.vmem [resolvable:$true] %s16
      %22 = dma.hbm_to_vmem [thread:$0]  %s1, 6144, %s17, [#allocation3], 192, 192, 12
    $region9: #{highway_forward.1} parent=1 // pred_fallthru
      _
    // Predicated region
    $region10: #{highway_forward.1} parent=1 // pred_check
      _
    $region11: #{highway_forward.1} parent=1 // pred_check_branch
      %24 = sbr.rel (0) target = $region13
    $region12: #{highway_forward.1} parent=1 // pred_region
      _
    $region13: #{highway_forward.1} parent=1 // pred_fallthru
      _
    // Predicated region
    $region14: #{highway_forward.1} parent=1 // pred_check
      _
    $region15: #{highway_forward.1} parent=1 // pred_check_branch
      %26 = sbr.rel (0) target = $region17
    $region16: #{highway_forward.1} parent=1 // pred_region
      %27 = dma.done [#allocation3], 6144
    $region17: #{highway_forward.1} parent=1 // pred_fallthru
      _
    %v29 = vld [vmem:[%s0] sm:$0xff]
    %v30 = vld [vmem:[%s0 + $0x8] sm:$0xff]
    %v31 = vpack.c.bf16 %v30, %v29
    %v32 = vld [vmem:[#allocation2] sm:$0xff]
    %v33 = vld [vmem:[#allocation2 + $0x8] sm:$0xf]
    %v34 = vld [vmem:[#allocation2 + $0xc] sm:$0xff]
    %v35 = vld [vmem:[#allocation2 + $0x14] sm:$0xf]
    %v36 = vld [vmem:[#allocation2 + $0x18] sm:$0xff]
    %v37 = vld [vmem:[#allocation2 + $0x20] sm:$0xf]
    %v38 = vld [vmem:[#allocation2 + $0x24] sm:$0xff]
    %v39 = vld [vmem:[#allocation2 + $0x2c] sm:$0xf]
    %v40 = vld [vmem:[#allocation2 + $0x30] sm:$0xff]
    %v41 = vld [vmem:[#allocation2 + $0x38] sm:$0xf]
    %v42 = vld [vmem:[#allocation2 + $0x3c] sm:$0xff]
    %v43 = vld [vmem:[#allocation2 + $0x44] sm:$0xf]
    %v44 = vld [vmem:[#allocation2 + $0x48] sm:$0xff]
    %v45 = vld [vmem:[#allocation2 + $0x50] sm:$0xf]
    %v46 = vld [vmem:[#allocation2 + $0x54] sm:$0xff]
    %v47 = vld [vmem:[#allocation2 + $0x5c] sm:$0xf]
    %v48 = vld [vmem:[#allocation2 + $0x60] sm:$0xff]
    %v49 = vld [vmem:[#allocation2 + $0x68] sm:$0xf]
    %v50 = vld [vmem:[#allocation2 + $0x6c] sm:$0xff]
    %v51 = vld [vmem:[#allocation2 + $0x74] sm:$0xf]
    %v52 = vld [vmem:[#allocation2 + $0x78] sm:$0xff]
    %v53 = vld [vmem:[#allocation2 + $0x80] sm:$0xf]
    %v54 = vld [vmem:[#allocation2 + $0x84] sm:$0xff]
    %v55 = vld [vmem:[#allocation2 + $0x8c] sm:$0xf]
    %v56 = vld [vmem:[#allocation2 + $0x90] sm:$0xff]
    %v57 = vld [vmem:[#allocation2 + $0x98] sm:$0xf]
    %v58 = vld [vmem:[#allocation2 + $0x9c] sm:$0xff]
    %v59 = vld [vmem:[#allocation2 + $0xa4] sm:$0xf]
    %v60 = vld [vmem:[#allocation2 + $0xa8] sm:$0xff]
    %v61 = vld [vmem:[#allocation2 + $0xb0] sm:$0xf]
    %v62 = vld [vmem:[#allocation2 + $0xb4] sm:$0xff]
    %v63 = vld [vmem:[#allocation2 + $0xbc] sm:$0xf]
    %v64 = vld [vmem:[%s2] sm:$0x7]
    %v66 = vlaneseq
    %v67 = vshrl.u32 %v66, 7
    %v68 = vsub.s32 0, %v67
    %v69 = vrot.slane %v64, %v68
    %v70 = vlaneseq
    %v71 = vshrl.u32 %v70, 7
    %v72 = vsub.s32 1, %v71
    %v73 = vrot.slane %v64, %v72
    %v74 = vlaneseq
    %v75 = vshrl.u32 %v74, 7
    %v76 = vsub.s32 2, %v75
    %v77 = vrot.slane %v64, %v76
    %v113 = vunpack.c.l.b16 %v32
    %v114 = vunpack.c.h.b16 %v32
    %v115 = vunpack.c.l.b16 %v33
    %v116 = vunpack.c.l.b16 %v34
    %v117 = vunpack.c.h.b16 %v34
    %v118 = vunpack.c.l.b16 %v35
    %v119 = vunpack.c.l.b16 %v36
    %v120 = vunpack.c.h.b16 %v36
    %v121 = vunpack.c.l.b16 %v37
    %v122 = vunpack.c.l.b16 %v38
    %v123 = vunpack.c.h.b16 %v38
    %v124 = vunpack.c.l.b16 %v39
    %v125 = vunpack.c.l.b16 %v40
    %v126 = vunpack.c.h.b16 %v40
    %v127 = vunpack.c.l.b16 %v41
    %v128 = vunpack.c.l.b16 %v42
    %v129 = vunpack.c.h.b16 %v42
    %v130 = vunpack.c.l.b16 %v43
    %v131 = vunpack.c.l.b16 %v44
    %v132 = vunpack.c.h.b16 %v44
    %v133 = vunpack.c.l.b16 %v45
    %v134 = vunpack.c.l.b16 %v46
    %v135 = vunpack.c.h.b16 %v46
    %v136 = vunpack.c.l.b16 %v47
    %v137 = vunpack.c.l.b16 %v48
    %v138 = vunpack.c.h.b16 %v48
    %v139 = vunpack.c.l.b16 %v49
    %v140 = vunpack.c.l.b16 %v50
    %v141 = vunpack.c.h.b16 %v50
    %v142 = vunpack.c.l.b16 %v51
    %v143 = vunpack.c.l.b16 %v52
    %v144 = vunpack.c.h.b16 %v52
    %v145 = vunpack.c.l.b16 %v53
    %v146 = vunpack.c.l.b16 %v54
    %v147 = vunpack.c.h.b16 %v54
    %v148 = vunpack.c.l.b16 %v55
    %v149 = vunpack.c.l.b16 %v56
    %v150 = vunpack.c.h.b16 %v56
    %v151 = vunpack.c.l.b16 %v57
    %v152 = vunpack.c.l.b16 %v58
    %v153 = vunpack.c.h.b16 %v58
    %v154 = vunpack.c.l.b16 %v59
    %v155 = vunpack.c.l.b16 %v60
    %v156 = vunpack.c.h.b16 %v60
    %v157 = vunpack.c.l.b16 %v61
    %v158 = vunpack.c.l.b16 %v62
    %v159 = vunpack.c.h.b16 %v62
    %v160 = vunpack.c.l.b16 %v63
    %v161 = vpack.c.b16 %v116, %v113
    %v162 = vpack.c.b16 %v117, %v114
    %v163 = vpack.c.b16 %v118, %v115
    %v164 = vpack.c.b16 %v122, %v119
    %v165 = vpack.c.b16 %v123, %v120
    %v166 = vpack.c.b16 %v124, %v121
    %v167 = vpack.c.b16 %v128, %v125
    %v168 = vpack.c.b16 %v129, %v126
    %v169 = vpack.c.b16 %v130, %v127
    %v170 = vpack.c.b16 %v134, %v131
    %v171 = vpack.c.b16 %v135, %v132
    %v172 = vpack.c.b16 %v136, %v133
    %v173 = vpack.c.b16 %v140, %v137
    %v174 = vpack.c.b16 %v141, %v138
    %v175 = vpack.c.b16 %v142, %v139
    %v176 = vpack.c.b16 %v146, %v143
    %v177 = vpack.c.b16 %v147, %v144
    %v178 = vpack.c.b16 %v148, %v145
    %v179 = vpack.c.b16 %v152, %v149
    %v180 = vpack.c.b16 %v153, %v150
    %v181 = vpack.c.b16 %v154, %v151
    %v182 = vpack.c.b16 %v158, %v155
    %v183 = vpack.c.b16 %v159, %v156
    %v184 = vpack.c.b16 %v160, %v157
    %209 = vmatprep.subr.bf16.mxu0 %v162
    %210 = vmatpush1.bf16.msra.mxu0 %v161
    %211 = vmatprep.subr.bf16.mxu0 %v165
    %212 = vmatpush1.bf16.msra.mxu0 %v164
    %213 = vmatprep.subr.bf16.mxu0 %v168
    %214 = vmatpush1.bf16.msra.mxu0 %v167
    %215 = vmatprep.subr.bf16.mxu0 %v171
    %216 = vmatpush1.bf16.msra.mxu0 %v170
    %217 = vmatprep.subr.bf16.mxu0 %v174
    %218 = vmatpush1.bf16.msra.mxu0 %v173
    %219 = vmatprep.subr.bf16.mxu0 %v177
    %220 = vmatpush1.bf16.msra.mxu0 %v176
    %221 = vmatprep.subr.bf16.mxu0 %v180
    %222 = vmatpush1.bf16.msra.mxu0 %v179
    %223 = vmatprep.subr.bf16.mxu0 %v183
    %224 = vmatpush1.bf16.msra.mxu0 %v182
    %225 = vmatprep.subr.bf16.mxu0 0
    %226 = vmatpush1.bf16.msra.mxu0 0
    %227 = vmatprep.subr.bf16.mxu0 0
    %228 = vmatpush1.bf16.msra.mxu0 0
    %229 = vmatprep.subr.bf16.mxu0 0
    %230 = vmatpush1.bf16.msra.mxu0 0
    %231 = vmatprep.subr.bf16.mxu0 0
    %232 = vmatpush1.bf16.msra.mxu0 0
    %233 = vmatprep.subr.bf16.mxu0 0
    %234 = vmatpush1.bf16.msra.mxu0 0
    %235 = vmatprep.subr.bf16.mxu0 0
    %236 = vmatpush1.bf16.msra.mxu0 0
    %237 = vmatprep.subr.bf16.mxu0 0
    %238 = vmatpush1.bf16.msra.mxu0 0
    %239 = vmatprep.subr.bf16.mxu0 0
    %240 = vmatpush1.bf16.msra.mxu0 0
    %241 = vmatprep.mubr.bf16.mxu0 0
    %242 = vmatmul.mubr.bf16.gmra.mrb[0].mxu0 %v31
    %v243 = vpop.f32.mrb[0].mxu0
    %v244 = vadd.f32 %v69, %v243
    %v245 = vpop.f32.mrb[0].mxu0
    %v246 = vadd.f32 %v73, %v245
    %v247 = vpop.f32.mrb[0].mxu0
    %v248 = vadd.f32 %v69, %v247
    %v249 = vpop.f32.mrb[0].mxu0
    %v250 = vadd.f32 %v73, %v249
    %251 = vdwg.mxu0
    %252 = vmatprep.subr.bf16.mxu0 0
    %253 = vmatpush1.bf16.msra.mxu0 %v163
    %254 = vmatprep.subr.bf16.mxu0 0
    %255 = vmatpush1.bf16.msra.mxu0 %v166
    %256 = vmatprep.subr.bf16.mxu0 0
    %257 = vmatpush1.bf16.msra.mxu0 %v169
    %258 = vmatprep.subr.bf16.mxu0 0
    %259 = vmatpush1.bf16.msra.mxu0 %v172
    %260 = vmatprep.subr.bf16.mxu0 0
    %261 = vmatpush1.bf16.msra.mxu0 %v175
    %262 = vmatprep.subr.bf16.mxu0 0
    %263 = vmatpush1.bf16.msra.mxu0 %v178
    %264 = vmatprep.subr.bf16.mxu0 0
    %265 = vmatpush1.bf16.msra.mxu0 %v181
    %266 = vmatprep.subr.bf16.mxu0 0
    %267 = vmatpush1.bf16.msra.mxu0 %v184
    %268 = vmatprep.subr.bf16.mxu0 0
    %269 = vmatpush1.bf16.msra.mxu0 0
    %270 = vmatprep.subr.bf16.mxu0 0
    %271 = vmatpush1.bf16.msra.mxu0 0
    %272 = vmatprep.subr.bf16.mxu0 0
    %273 = vmatpush1.bf16.msra.mxu0 0
    %274 = vmatprep.subr.bf16.mxu0 0
    %275 = vmatpush1.bf16.msra.mxu0 0
    %276 = vmatprep.subr.bf16.mxu0 0
    %277 = vmatpush1.bf16.msra.mxu0 0
    %278 = vmatprep.subr.bf16.mxu0 0
    %279 = vmatpush1.bf16.msra.mxu0 0
    %280 = vmatprep.subr.bf16.mxu0 0
    %281 = vmatpush1.bf16.msra.mxu0 0
    %282 = vmatprep.subr.bf16.mxu0 0
    %283 = vmatpush1.bf16.msra.mxu0 0
    %284 = vmatprep.mubr.bf16.mxu0 0
    %285 = vmatmul.mubr.bf16.gmra.mrb[0].mxu0 %v31
    %v286 = vpop.f32.mrb[0].mxu0
    %v287 = vadd.f32 %v77, %v286
    %v288 = vpop.f32.mrb[0].mxu0
    %v289 = vpop.f32.mrb[0].mxu0
    %v290 = vadd.f32 %v77, %v289
    %v291 = vpop.f32.mrb[0].mxu0
    %292 = vdwg.mxu0
    %v293 = vxor.u32 %v244, 2147483648
    %v294 = vxor.u32 %v248, 2147483648
    %v295 = vmul.f32 %v293, 1.442695
    %v296 = vpow.pop %v295
    %v297 = vmul.f32 %v294, 1.442695
    %v298 = vpow.pop %v297
    %v299 = vadd.f32 %v296, 1.0
    %v300 = vadd.f32 %v298, 1.0
    %v301 = vrcp.pop %v299
    %v302 = vmul.f32 1.0, %v301
    %v303 = vrcp.pop %v300
    %v304 = vmul.f32 1.0, %v303
    %v305 = vmax.f32 %v246, 0.0
    %v306 = vmax.f32 %v250, 0.0
    %v307 = vsub.f32 %v305, %v287
    %v308 = vsub.f32 %v306, %v290
    %v309 = vmul.f32 %v302, %v307
    %v310 = vmul.f32 %v304, %v308
    %v311 = vadd.f32 %v287, %v309
    %v312 = vadd.f32 %v290, %v310
    %v313 = vpack.c.bf16 %v312, %v311
    %s314 = scalar_lea.vmem [#allocation2], 192
    %v315 = vld [vmem:[%s314] sm:$0xff]
    %v316 = vld [vmem:[%s314 + $0x8] sm:$0xf]
    %v317 = vld [vmem:[%s314 + $0xc] sm:$0xff]
    %v318 = vld [vmem:[%s314 + $0x14] sm:$0xf]
    %v319 = vld [vmem:[%s314 + $0x18] sm:$0xff]
    %v320 = vld [vmem:[%s314 + $0x20] sm:$0xf]
    %v321 = vld [vmem:[%s314 + $0x24] sm:$0xff]
    %v322 = vld [vmem:[%s314 + $0x2c] sm:$0xf]
    %v323 = vld [vmem:[%s314 + $0x30] sm:$0xff]
    %v324 = vld [vmem:[%s314 + $0x38] sm:$0xf]
    %v325 = vld [vmem:[%s314 + $0x3c] sm:$0xff]
    %v326 = vld [vmem:[%s314 + $0x44] sm:$0xf]
    %v327 = vld [vmem:[%s314 + $0x48] sm:$0xff]
    %v328 = vld [vmem:[%s314 + $0x50] sm:$0xf]
    %v329 = vld [vmem:[%s314 + $0x54] sm:$0xff]
    %v330 = vld [vmem:[%s314 + $0x5c] sm:$0xf]
    %v331 = vld [vmem:[%s314 + $0x60] sm:$0xff]
    %v332 = vld [vmem:[%s314 + $0x68] sm:$0xf]
    %v333 = vld [vmem:[%s314 + $0x6c] sm:$0xff]
    %v334 = vld [vmem:[%s314 + $0x74] sm:$0xf]
    %v335 = vld [vmem:[%s314 + $0x78] sm:$0xff]
    %v336 = vld [vmem:[%s314 + $0x80] sm:$0xf]
    %v337 = vld [vmem:[%s314 + $0x84] sm:$0xff]
    %v338 = vld [vmem:[%s314 + $0x8c] sm:$0xf]
    %v339 = vld [vmem:[%s314 + $0x90] sm:$0xff]
    %v340 = vld [vmem:[%s314 + $0x98] sm:$0xf]
    %v341 = vld [vmem:[%s314 + $0x9c] sm:$0xff]
    %v342 = vld [vmem:[%s314 + $0xa4] sm:$0xf]
    %v343 = vld [vmem:[%s314 + $0xa8] sm:$0xff]
    %v344 = vld [vmem:[%s314 + $0xb0] sm:$0xf]
    %v345 = vld [vmem:[%s314 + $0xb4] sm:$0xff]
    %v346 = vld [vmem:[%s314 + $0xbc] sm:$0xf]
    %s347 = scalar_lea.vmem %s2, 3
    %v348 = vld [vmem:[%s347] sm:$0x7]
    %v350 = vlaneseq
    %v351 = vshrl.u32 %v350, 7
    %v352 = vsub.s32 0, %v351
    %v353 = vrot.slane %v348, %v352
    %v354 = vlaneseq
    %v355 = vshrl.u32 %v354, 7
    %v356 = vsub.s32 1, %v355
    %v357 = vrot.slane %v348, %v356
    %v358 = vlaneseq
    %v359 = vshrl.u32 %v358, 7
    %v360 = vsub.s32 2, %v359
    %v361 = vrot.slane %v348, %v360
    %v397 = vunpack.c.l.b16 %v315
    %v398 = vunpack.c.h.b16 %v315
    %v399 = vunpack.c.l.b16 %v316
    %v400 = vunpack.c.l.b16 %v317
    %v401 = vunpack.c.h.b16 %v317
    %v402 = vunpack.c.l.b16 %v318
    %v403 = vunpack.c.l.b16 %v319
    %v404 = vunpack.c.h.b16 %v319
    %v405 = vunpack.c.l.b16 %v320
    %v406 = vunpack.c.l.b16 %v321
    %v407 = vunpack.c.h.b16 %v321
    %v408 = vunpack.c.l.b16 %v322
    %v409 = vunpack.c.l.b16 %v323
    %v410 = vunpack.c.h.b16 %v323
    %v411 = vunpack.c.l.b16 %v324
    %v412 = vunpack.c.l.b16 %v325
    %v413 = vunpack.c.h.b16 %v325
    %v414 = vunpack.c.l.b16 %v326
    %v415 = vunpack.c.l.b16 %v327
    %v416 = vunpack.c.h.b16 %v327
    %v417 = vunpack.c.l.b16 %v328
    %v418 = vunpack.c.l.b16 %v329
    %v419 = vunpack.c.h.b16 %v329
    %v420 = vunpack.c.l.b16 %v330
    %v421 = vunpack.c.l.b16 %v331
    %v422 = vunpack.c.h.b16 %v331
    %v423 = vunpack.c.l.b16 %v332
    %v424 = vunpack.c.l.b16 %v333
    %v425 = vunpack.c.h.b16 %v333
    %v426 = vunpack.c.l.b16 %v334
    %v427 = vunpack.c.l.b16 %v335
    %v428 = vunpack.c.h.b16 %v335
    %v429 = vunpack.c.l.b16 %v336
    %v430 = vunpack.c.l.b16 %v337
    %v431 = vunpack.c.h.b16 %v337
    %v432 = vunpack.c.l.b16 %v338
    %v433 = vunpack.c.l.b16 %v339
    %v434 = vunpack.c.h.b16 %v339
    %v435 = vunpack.c.l.b16 %v340
    %v436 = vunpack.c.l.b16 %v341
    %v437 = vunpack.c.h.b16 %v341
    %v438 = vunpack.c.l.b16 %v342
    %v439 = vunpack.c.l.b16 %v343
    %v440 = vunpack.c.h.b16 %v343
    %v441 = vunpack.c.l.b16 %v344
    %v442 = vunpack.c.l.b16 %v345
    %v443 = vunpack.c.h.b16 %v345
    %v444 = vunpack.c.l.b16 %v346
    %v445 = vpack.c.b16 %v400, %v397
    %v446 = vpack.c.b16 %v401, %v398
    %v447 = vpack.c.b16 %v402, %v399
    %v448 = vpack.c.b16 %v406, %v403
    %v449 = vpack.c.b16 %v407, %v404
    %v450 = vpack.c.b16 %v408, %v405
    %v451 = vpack.c.b16 %v412, %v409
    %v452 = vpack.c.b16 %v413, %v410
    %v453 = vpack.c.b16 %v414, %v411
    %v454 = vpack.c.b16 %v418, %v415
    %v455 = vpack.c.b16 %v419, %v416
    %v456 = vpack.c.b16 %v420, %v417
    %v457 = vpack.c.b16 %v424, %v421
    %v458 = vpack.c.b16 %v425, %v422
    %v459 = vpack.c.b16 %v426, %v423
    %v460 = vpack.c.b16 %v430, %v427
    %v461 = vpack.c.b16 %v431, %v428
    %v462 = vpack.c.b16 %v432, %v429
    %v463 = vpack.c.b16 %v436, %v433
    %v464 = vpack.c.b16 %v437, %v434
    %v465 = vpack.c.b16 %v438, %v435
    %v466 = vpack.c.b16 %v442, %v439
    %v467 = vpack.c.b16 %v443, %v440
    %v468 = vpack.c.b16 %v444, %v441
    %493 = vmatprep.subr.bf16.mxu0 %v446
    %494 = vmatpush1.bf16.msra.mxu0 %v445
    %495 = vmatprep.subr.bf16.mxu0 %v449
    %496 = vmatpush1.bf16.msra.mxu0 %v448
    %497 = vmatprep.subr.bf16.mxu0 %v452
    %498 = vmatpush1.bf16.msra.mxu0 %v451
    %499 = vmatprep.subr.bf16.mxu0 %v455
    %500 = vmatpush1.bf16.msra.mxu0 %v454
    %501 = vmatprep.subr.bf16.mxu0 %v458
    %502 = vmatpush1.bf16.msra.mxu0 %v457
    %503 = vmatprep.subr.bf16.mxu0 %v461
    %504 = vmatpush1.bf16.msra.mxu0 %v460
    %505 = vmatprep.subr.bf16.mxu0 %v464
    %506 = vmatpush1.bf16.msra.mxu0 %v463
    %507 = vmatprep.subr.bf16.mxu0 %v467
    %508 = vmatpush1.bf16.msra.mxu0 %v466
    %509 = vmatprep.subr.bf16.mxu0 0
    %510 = vmatpush1.bf16.msra.mxu0 0
    %511 = vmatprep.subr.bf16.mxu0 0
    %512 = vmatpush1.bf16.msra.mxu0 0
    %513 = vmatprep.subr.bf16.mxu0 0
    %514 = vmatpush1.bf16.msra.mxu0 0
    %515 = vmatprep.subr.bf16.mxu0 0
    %516 = vmatpush1.bf16.msra.mxu0 0
    %517 = vmatprep.subr.bf16.mxu0 0
    %518 = vmatpush1.bf16.msra.mxu0 0
    %519 = vmatprep.subr.bf16.mxu0 0
    %520 = vmatpush1.bf16.msra.mxu0 0
    %521 = vmatprep.subr.bf16.mxu0 0
    %522 = vmatpush1.bf16.msra.mxu0 0
    %523 = vmatprep.subr.bf16.mxu0 0
    %524 = vmatpush1.bf16.msra.mxu0 0
    %525 = vmatprep.mubr.bf16.mxu0 0
    %526 = vmatmul.mubr.bf16.gmra.mrb[0].mxu0 %v313
    %v527 = vpop.f32.mrb[0].mxu0
    %v528 = vadd.f32 %v353, %v527
    %v529 = vpop.f32.mrb[0].mxu0
    %v530 = vadd.f32 %v357, %v529
    %v531 = vpop.f32.mrb[0].mxu0
    %v532 = vadd.f32 %v353, %v531
    %v533 = vpop.f32.mrb[0].mxu0
    %v534 = vadd.f32 %v357, %v533
    %535 = vdwg.mxu0
    %536 = vmatprep.subr.bf16.mxu0 0
    %537 = vmatpush1.bf16.msra.mxu0 %v447
    %538 = vmatprep.subr.bf16.mxu0 0
    %539 = vmatpush1.bf16.msra.mxu0 %v450
    %540 = vmatprep.subr.bf16.mxu0 0
    %541 = vmatpush1.bf16.msra.mxu0 %v453
    %542 = vmatprep.subr.bf16.mxu0 0
    %543 = vmatpush1.bf16.msra.mxu0 %v456
    %544 = vmatprep.subr.bf16.mxu0 0
    %545 = vmatpush1.bf16.msra.mxu0 %v459
    %546 = vmatprep.subr.bf16.mxu0 0
    %547 = vmatpush1.bf16.msra.mxu0 %v462
    %548 = vmatprep.subr.bf16.mxu0 0
    %549 = vmatpush1.bf16.msra.mxu0 %v465
    %550 = vmatprep.subr.bf16.mxu0 0
    %551 = vmatpush1.bf16.msra.mxu0 %v468
    %552 = vmatprep.subr.bf16.mxu0 0
    %553 = vmatpush1.bf16.msra.mxu0 0
    %554 = vmatprep.subr.bf16.mxu0 0
    %555 = vmatpush1.bf16.msra.mxu0 0
    %556 = vmatprep.subr.bf16.mxu0 0
    %557 = vmatpush1.bf16.msra.mxu0 0
    %558 = vmatprep.subr.bf16.mxu0 0
    %559 = vmatpush1.bf16.msra.mxu0 0
    %560 = vmatprep.subr.bf16.mxu0 0
    %561 = vmatpush1.bf16.msra.mxu0 0
    %562 = vmatprep.subr.bf16.mxu0 0
    %563 = vmatpush1.bf16.msra.mxu0 0
    %564 = vmatprep.subr.bf16.mxu0 0
    %565 = vmatpush1.bf16.msra.mxu0 0
    %566 = vmatprep.subr.bf16.mxu0 0
    %567 = vmatpush1.bf16.msra.mxu0 0
    %568 = vmatprep.mubr.bf16.mxu0 0
    %569 = vmatmul.mubr.bf16.gmra.mrb[0].mxu0 %v313
    %v570 = vpop.f32.mrb[0].mxu0
    %v571 = vadd.f32 %v361, %v570
    %v572 = vpop.f32.mrb[0].mxu0
    %v573 = vpop.f32.mrb[0].mxu0
    %v574 = vadd.f32 %v361, %v573
    %v575 = vpop.f32.mrb[0].mxu0
    %576 = vdwg.mxu0
    %v577 = vxor.u32 %v528, 2147483648
    %v578 = vxor.u32 %v532, 2147483648
    %v579 = vmul.f32 %v577, 1.442695
    %v580 = vpow.pop %v579
    %v581 = vmul.f32 %v578, 1.442695
    %v582 = vpow.pop %v581
    %v583 = vadd.f32 %v580, 1.0
    %v584 = vadd.f32 %v582, 1.0
    %v585 = vrcp.pop %v583
    %v586 = vmul.f32 1.0, %v585
    %v587 = vrcp.pop %v584
    %v588 = vmul.f32 1.0, %v587
    %v589 = vmax.f32 %v530, 0.0
    %v590 = vmax.f32 %v534, 0.0
    %v591 = vsub.f32 %v589, %v571
    %v592 = vsub.f32 %v590, %v574
    %v593 = vmul.f32 %v586, %v591
    %v594 = vmul.f32 %v588, %v592
    %v595 = vadd.f32 %v571, %v593
    %v596 = vadd.f32 %v574, %v594
    %597 = vst [vmem:[%s3] sm:$0xff] %v595
    %598 = vst [vmem:[%s3 + $0x8] sm:$0xff] %v596
    // Predicated region
    $region18: #{highway_forward.1} parent=1 // pred_check
      _
    $region19: #{highway_forward.1} parent=1 // pred_check_branch
      %600 = sbr.rel (0) target = $region21
    $region20: #{highway_forward.1} parent=1 // pred_region
      _
    $region21: #{highway_forward.1} parent=1 // pred_fallthru
      _
    // Predicated region
    $region22: #{highway_forward.1} parent=1 // pred_check
      _
    $region23: #{highway_forward.1} parent=1 // pred_check_branch
      %602 = sbr.rel (0) target = $region25
    $region24: #{highway_forward.1} parent=1 // pred_region
      _
    $region25: #{highway_forward.1} parent=1 // pred_fallthru
      _
    %603 = vsyncpa [#allocation3], 1

</llo_original>
